<compile_context>
chip_gen: v5e
topology: v5e:2x2
jax: 0.10.0
libtpu: 0.0.40
codegen_flags: <defaults>
</compile_context>

<pallas_src>
import functools

import jax
import jax.numpy as jnp
from jax.experimental import pallas as pl
from jax.experimental.pallas import tpu as pltpu


def _round_up(n, m):
    return (n + m - 1) // m * m


def _mlp_kernel(x_ref, w1_ref, b1_ref, w2_ref, b2_ref, w3_ref, b3_ref, o_ref):
    # Batch on lanes everywhere: x_ref is (8, TILE_B).
    def sigmoid(v):
        # One EUP op per element (tanh) instead of exp + reciprocal.
        return 0.5 * jnp.tanh(0.5 * v) + 0.5

    x = x_ref[...]                                                        # (8, TB)
    h1 = jnp.dot(w1_ref[...], x, preferred_element_type=jnp.float32)      # (6, TB)
    h1 = sigmoid(h1 + b1_ref[...])
    h2 = jnp.dot(w2_ref[...], h1, preferred_element_type=jnp.float32)     # (4, TB)
    h2 = sigmoid(h2 + b2_ref[...])
    y = jnp.dot(w3_ref[...], h2, preferred_element_type=jnp.float32)      # (1, TB)
    o_ref[...] = sigmoid(y + b3_ref[...]).astype(o_ref.dtype)


@functools.partial(jax.jit, static_argnames=("tile_b",))
def mlp_forward(x, params, *, tile_b=1024):
    """Fused 3-layer MLP forward.

    x: (B, 8) float32
    params: dict with w1 (6,8), b1 (6,1), w2 (4,6), b2 (4,1), w3 (1,4), b3 (1,1)
            (PyTorch nn.Linear (out,in) weight layout; biases stored as columns.)
    returns: (B, 1) float32
    """
    B = x.shape[0]
    assert x.shape[1] == 8

    # Pick a lane-dense batch tile (multiple of 128) and pad the batch to a tile multiple.
    tb = min(tile_b, _round_up(B, 128))
    Bp = _round_up(B, tb)
    n_tiles = Bp // tb

    # Internal layout: batch on the lane axis -> x^T, zero-padded tail tile.
    xt = jnp.zeros((8, Bp), dtype=jnp.float32).at[:, :B].set(x.T.astype(jnp.float32))

    w1, b1 = params["w1"], params["b1"]
    w2, b2 = params["w2"], params["b2"]
    w3, b3 = params["w3"], params["b3"]

    resident = lambda a: pl.BlockSpec(a.shape, lambda i: (0,) * a.ndim)

    # ~152 flops, ~36 bytes of HBM traffic, 11 transcendentals per batch element.
    cost = pl.CostEstimate(flops=152 * Bp, transcendentals=11 * Bp,
                           bytes_accessed=36 * Bp)

    y_t = pl.pallas_call(
        _mlp_kernel,
        out_shape=jax.ShapeDtypeStruct((1, Bp), jnp.float32),
        grid=(n_tiles,),
        in_specs=[
            pl.BlockSpec((8, tb), lambda i: (0, i)),   # x^T tile (lane-dense)
            resident(w1), resident(b1),
            resident(w2), resident(b2),
            resident(w3), resident(b3),
        ],
        out_specs=pl.BlockSpec((1, tb), lambda i: (0, i)),  # lane-dense output slab
        compiler_params=pltpu.CompilerParams(
            dimension_semantics=("parallel",)),
        cost_estimate=cost,
    )(xt, w1, b1, w2, b2, w3, b3)

    # Restore the external (B, 1) contract (wrapper-side layout plumbing).
    return y_t[:, :B].T


def init_params(key):
    """Deterministic init matching PyTorch nn.Linear shapes: W is (out, in), b is (out, 1)."""
    ks = jax.random.split(key, 6)

    def linear(kw, kb, fan_in, fan_out):
        bound = 1.0 / jnp.sqrt(fan_in)
        w = jax.random.uniform(kw, (fan_out, fan_in), jnp.float32, -bound, bound)
        b = jax.random.uniform(kb, (fan_out, 1), jnp.float32, -bound, bound)
        return w, b

    w1, b1 = linear(ks[0], ks[1], 8, 6)
    w2, b2 = linear(ks[2], ks[3], 6, 4)
    w3, b3 = linear(ks[4], ks[5], 4, 1)
    return dict(w1=w1, b1=b1, w2=w2, b2=b2, w3=w3, b3=b3)


def reference_forward(x, p):
    h1 = jax.nn.sigmoid(x @ p["w1"].T + p["b1"].T)
    h2 = jax.nn.sigmoid(h1 @ p["w2"].T + p["b2"].T)
    return jax.nn.sigmoid(h2 @ p["w3"].T + p["b3"].T)


if __name__ == "__main__":
    key = jax.random.PRNGKey(0)
    k_x, k_p, k_x2 = jax.random.split(key, 3)

    params = init_params(k_p)

    # Small batch (padded internally to one 128-wide lane tile).
    B = 8
    x = jax.random.normal(k_x, (B, 8), dtype=jnp.float32)
    y = jax.block_until_ready(mlp_forward(x, params))
    y_ref = reference_forward(x, params)
    assert y.shape == (B, 1)
    assert jnp.allclose(y, y_ref, atol=1e-5, rtol=1e-5)

    # Larger, non-multiple-of-128 batch to exercise multi-tile grid + tail padding.
    B2 = 300
    x2 = jax.random.normal(k_x2, (B2, 8), dtype=jnp.float32)
    y2 = jax.block_until_ready(mlp_forward(x2, params, tile_b=256))
    y2_ref = reference_forward(x2, params)
    assert y2.shape == (B2, 1)
    assert jnp.allclose(y2, y2_ref, atol=1e-5, rtol=1e-5)

    print("KERNEL_OK")
</pallas_src>

<mosaic_0001>
module attributes {stable_mosaic.version = 11 : i64} {
  func.func @_mlp_kernel(%arg0: i32, %arg1: memref<8x128xf32, #tpu.memory_space<vmem>>, %arg2: memref<6x8xf32, #tpu.memory_space<vmem>>, %arg3: memref<6x1xf32, #tpu.memory_space<vmem>>, %arg4: memref<4x6xf32, #tpu.memory_space<vmem>>, %arg5: memref<4x1xf32, #tpu.memory_space<vmem>>, %arg6: memref<1x4xf32, #tpu.memory_space<vmem>>, %arg7: memref<1x1xf32, #tpu.memory_space<vmem>>, %arg8: memref<1x128xf32, #tpu.memory_space<vmem>>) attributes {dimension_semantics = [#tpu.dimension_semantics<parallel>], iteration_bounds = array<i64: 1>, scalar_prefetch = 0 : i64, scratch_operands = 0 : i64, tpu.core_type = #tpu.core_type<tc>, window_params = [{transform_indices = @transform_0, window_bounds = array<i64: 8, 128>}, {pipeline_mode = #tpu.pipeline_mode<synchronous>, transform_indices = @transform_1, window_bounds = array<i64: 6, 8>}, {pipeline_mode = #tpu.pipeline_mode<synchronous>, transform_indices = @transform_2, window_bounds = array<i64: 6, 1>}, {pipeline_mode = #tpu.pipeline_mode<synchronous>, transform_indices = @transform_3, window_bounds = array<i64: 4, 6>}, {pipeline_mode = #tpu.pipeline_mode<synchronous>, transform_indices = @transform_4, window_bounds = array<i64: 4, 1>}, {pipeline_mode = #tpu.pipeline_mode<synchronous>, transform_indices = @transform_5, window_bounds = array<i64: 1, 4>}, {pipeline_mode = #tpu.pipeline_mode<synchronous>, transform_indices = @transform_6, window_bounds = array<i64: 1, 1>}, {transform_indices = @transform_7, window_bounds = array<i64: 1, 128>}]} {
    %c0 = arith.constant 0 : index
    %c0_0 = arith.constant 0 : index
    %0 = vector.load %arg1[%c0, %c0_0] : memref<8x128xf32, #tpu.memory_space<vmem>>, vector<8x128xf32>
    %c0_1 = arith.constant 0 : index
    %c0_2 = arith.constant 0 : index
    %1 = vector.load %arg2[%c0_1, %c0_2] : memref<6x8xf32, #tpu.memory_space<vmem>>, vector<6x8xf32>
    %cst = arith.constant dense<0.000000e+00> : vector<6x128xf32>
    %2 = tpu.matmul %1, %0, %cst {dimension_numbers = #tpu.dot_dimension_numbers<[1], [0], [0], [1], [0, 0, 1, 1], [], []>} : vector<6x8xf32>, vector<8x128xf32>, vector<6x128xf32> -> vector<6x128xf32>
    %c0_3 = arith.constant 0 : index
    %c0_4 = arith.constant 0 : index
    %3 = vector.load %arg3[%c0_3, %c0_4] : memref<6x1xf32, #tpu.memory_space<vmem>>, vector<6x1xf32>
    %4 = vector.broadcast %3 : vector<6x1xf32> to vector<6x128xf32>
    %5 = arith.addf %2, %4 : vector<6x128xf32>
    %cst_5 = arith.constant 5.000000e-01 : f32
    %6 = vector.broadcast %cst_5 : f32 to vector<6x128xf32>
    %7 = arith.mulf %6, %5 : vector<6x128xf32>
    %8 = math.tanh %7 : vector<6x128xf32>
    %cst_6 = arith.constant 5.000000e-01 : f32
    %9 = vector.broadcast %cst_6 : f32 to vector<6x128xf32>
    %10 = arith.mulf %9, %8 : vector<6x128xf32>
    %cst_7 = arith.constant 5.000000e-01 : f32
    %11 = vector.broadcast %cst_7 : f32 to vector<6x128xf32>
    %12 = arith.addf %10, %11 : vector<6x128xf32>
    %c0_8 = arith.constant 0 : index
    %c0_9 = arith.constant 0 : index
    %13 = vector.load %arg4[%c0_8, %c0_9] : memref<4x6xf32, #tpu.memory_space<vmem>>, vector<4x6xf32>
    %cst_10 = arith.constant dense<0.000000e+00> : vector<4x128xf32>
    %14 = tpu.matmul %13, %12, %cst_10 {dimension_numbers = #tpu.dot_dimension_numbers<[1], [0], [0], [1], [0, 0, 1, 1], [], []>} : vector<4x6xf32>, vector<6x128xf32>, vector<4x128xf32> -> vector<4x128xf32>
    %c0_11 = arith.constant 0 : index
    %c0_12 = arith.constant 0 : index
    %15 = vector.load %arg5[%c0_11, %c0_12] : memref<4x1xf32, #tpu.memory_space<vmem>>, vector<4x1xf32>
    %16 = vector.broadcast %15 : vector<4x1xf32> to vector<4x128xf32>
    %17 = arith.addf %14, %16 : vector<4x128xf32>
    %cst_13 = arith.constant 5.000000e-01 : f32
    %18 = vector.broadcast %cst_13 : f32 to vector<4x128xf32>
    %19 = arith.mulf %18, %17 : vector<4x128xf32>
    %20 = math.tanh %19 : vector<4x128xf32>
    %cst_14 = arith.constant 5.000000e-01 : f32
    %21 = vector.broadcast %cst_14 : f32 to vector<4x128xf32>
    %22 = arith.mulf %21, %20 : vector<4x128xf32>
    %cst_15 = arith.constant 5.000000e-01 : f32
    %23 = vector.broadcast %cst_15 : f32 to vector<4x128xf32>
    %24 = arith.addf %22, %23 : vector<4x128xf32>
    %c0_16 = arith.constant 0 : index
    %c0_17 = arith.constant 0 : index
    %25 = vector.load %arg6[%c0_16, %c0_17] : memref<1x4xf32, #tpu.memory_space<vmem>>, vector<1x4xf32>
    %cst_18 = arith.constant dense<0.000000e+00> : vector<1x128xf32>
    %26 = tpu.matmul %25, %24, %cst_18 {dimension_numbers = #tpu.dot_dimension_numbers<[1], [0], [0], [1], [0, 0, 1, 1], [], []>} : vector<1x4xf32>, vector<4x128xf32>, vector<1x128xf32> -> vector<1x128xf32>
    %c0_19 = arith.constant 0 : index
    %c0_20 = arith.constant 0 : index
    %27 = vector.load %arg7[%c0_19, %c0_20] : memref<1x1xf32, #tpu.memory_space<vmem>>, vector<1x1xf32>
    %28 = vector.broadcast %27 : vector<1x1xf32> to vector<1x128xf32>
    %29 = arith.addf %26, %28 : vector<1x128xf32>
    %cst_21 = arith.constant 5.000000e-01 : f32
    %30 = vector.broadcast %cst_21 : f32 to vector<1x128xf32>
    %31 = arith.mulf %30, %29 : vector<1x128xf32>
    %32 = math.tanh %31 : vector<1x128xf32>
    %cst_22 = arith.constant 5.000000e-01 : f32
    %33 = vector.broadcast %cst_22 : f32 to vector<1x128xf32>
    %34 = arith.mulf %33, %32 : vector<1x128xf32>
    %cst_23 = arith.constant 5.000000e-01 : f32
    %35 = vector.broadcast %cst_23 : f32 to vector<1x128xf32>
    %36 = arith.addf %34, %35 : vector<1x128xf32>
    %c0_24 = arith.constant 0 : index
    %c0_25 = arith.constant 0 : index
    %37 = vector.load %arg8[%c0_24, %c0_25] : memref<1x128xf32, #tpu.memory_space<vmem>>, vector<1x128xf32>
    tpu.vector_store %arg8[%c0_24, %c0_25], %36 {strides = array<i32>} : memref<1x128xf32, #tpu.memory_space<vmem>>, vector<1x128xf32>,
    return
  }
  func.func @transform_0(%arg0: i32) -> (i32, i32) {
    %c0_i32 = arith.constant 0 : i32
    %c0_i32_0 = arith.constant 0 : i32
    return %c0_i32, %arg0 : i32, i32
  }
  func.func @transform_1(%arg0: i32) -> (i32, i32) {
    %c0_i32 = arith.constant 0 : i32
    %c0_i32_0 = arith.constant 0 : i32
    %c0_i32_1 = arith.constant 0 : i32
    return %c0_i32, %c0_i32_0 : i32, i32
  }
  func.func @transform_2(%arg0: i32) -> (i32, i32) {
    %c0_i32 = arith.constant 0 : i32
    %c0_i32_0 = arith.constant 0 : i32
    %c0_i32_1 = arith.constant 0 : i32
    return %c0_i32, %c0_i32_0 : i32, i32
  }
  func.func @transform_3(%arg0: i32) -> (i32, i32) {
    %c0_i32 = arith.constant 0 : i32
    %c0_i32_0 = arith.constant 0 : i32
    %c0_i32_1 = arith.constant 0 : i32
    return %c0_i32, %c0_i32_0 : i32, i32
  }
  func.func @transform_4(%arg0: i32) -> (i32, i32) {
    %c0_i32 = arith.constant 0 : i32
    %c0_i32_0 = arith.constant 0 : i32
    %c0_i32_1 = arith.constant 0 : i32
    return %c0_i32, %c0_i32_0 : i32, i32
  }
  func.func @transform_5(%arg0: i32) -> (i32, i32) {
    %c0_i32 = arith.constant 0 : i32
    %c0_i32_0 = arith.constant 0 : i32
    %c0_i32_1 = arith.constant 0 : i32
    return %c0_i32, %c0_i32_0 : i32, i32
  }
  func.func @transform_6(%arg0: i32) -> (i32, i32) {
    %c0_i32 = arith.constant 0 : i32
    %c0_i32_0 = arith.constant 0 : i32
    %c0_i32_1 = arith.constant 0 : i32
    return %c0_i32, %c0_i32_0 : i32, i32
  }
  func.func @transform_7(%arg0: i32) -> (i32, i32) {
    %c0_i32 = arith.constant 0 : i32
    %c0_i32_0 = arith.constant 0 : i32
    return %c0_i32, %arg0 : i32, i32
  }
}

</mosaic_0001>

<llo_original>
// kernel: mlp_forward.1
$region0: #{mlp_forward.1}
  #allocation0 [shape = 'u32[]', space=smem, size = 0x4, offset = 0x4, fixed_abs, tag = 'smem constant byte address 0x4 - core index']
  #allocation1 [shape = 'u32[72,128]{1,0:T(1,128)}', space=vmem, size = 0x9000, scoped, tag = 'internal scratch']
  #allocation2 [shape = 'f32[1,1]{1,0:T(1,128)S(1)}', space=vmem, size = 0x200, scoped, tag = 'scoped memory for mlp_forward.1']
  %s0 = inlined_call_operand.vmem [shape: f32[8,128], index: 0, kind: input, shape index: {}]
  %s1 = inlined_call_operand.vmem [shape: f32[6,8], index: 1, kind: input, shape index: {}]
  %s2 = inlined_call_operand.vmem [shape: f32[6,1], index: 2, kind: input, shape index: {}]
  %s3 = inlined_call_operand.vmem [shape: f32[4,6], index: 3, kind: input, shape index: {}]
  %s4 = inlined_call_operand.vmem [shape: f32[4,1], index: 4, kind: input, shape index: {}]
  %s5 = inlined_call_operand.vmem [shape: f32[1,4], index: 5, kind: input, shape index: {}]
  %s6 = inlined_call_operand.<no memory space> [shape: f32[1,1], index: 6, kind: input, shape index: {}]
  %s7 = inlined_call_operand.vmem [shape: f32[1,128], index: 7, kind: output, shape index: {}]
  %s8 = sld [smem:[#allocation0]]
  $region38: #{mlp_forward.1} parent=0
    _
  %s10 = ssub.s32 1, %s8
  %s11 = scalar_select 0, %s10, %s8
  %v12 = vstv %s6
  %13 = vst [vmem:[#allocation2] sm:$0x1] %v12
  // Predicated region
  $region2: #{mlp_forward.1} parent=0 // pred_check
    _
  $region3: #{mlp_forward.1} parent=0 // pred_check_branch
    %15 = sbr.rel (0) target = $region5
  $region4: #{mlp_forward.1} parent=0 // pred_region
    _
  $region5: #{mlp_forward.1} parent=0 // pred_fallthru
    _
  // Predicated region
  $region6: #{mlp_forward.1} parent=0 // pred_check
    _
  $region7: #{mlp_forward.1} parent=0 // pred_check_branch
    %17 = sbr.rel (0) target = $region9
  $region8: #{mlp_forward.1} parent=0 // pred_region
    _
  $region9: #{mlp_forward.1} parent=0 // pred_fallthru
    _
  // Predicated region
  $region10: #{mlp_forward.1} parent=0 // pred_check
    _
  $region11: #{mlp_forward.1} parent=0 // pred_check_branch
    %19 = sbr.rel (0) target = $region13
  $region12: #{mlp_forward.1} parent=0 // pred_region
    _
  $region13: #{mlp_forward.1} parent=0 // pred_fallthru
    _
  // Predicated region
  $region14: #{mlp_forward.1} parent=0 // pred_check
    _
  $region15: #{mlp_forward.1} parent=0 // pred_check_branch
    %21 = sbr.rel (0) target = $region17
  $region16: #{mlp_forward.1} parent=0 // pred_region
    _
  $region17: #{mlp_forward.1} parent=0 // pred_fallthru
    _
  // Predicated region
  $region18: #{mlp_forward.1} parent=0 // pred_check
    _
  $region19: #{mlp_forward.1} parent=0 // pred_check_branch
    %23 = sbr.rel (0) target = $region21
  $region20: #{mlp_forward.1} parent=0 // pred_region
    _
  $region21: #{mlp_forward.1} parent=0 // pred_fallthru
    _
  // Predicated region
  $region22: #{mlp_forward.1} parent=0 // pred_check
    _
  $region23: #{mlp_forward.1} parent=0 // pred_check_branch
    %25 = sbr.rel (0) target = $region25
  $region24: #{mlp_forward.1} parent=0 // pred_region
    _
  $region25: #{mlp_forward.1} parent=0 // pred_fallthru
    _
  // Predicated region
  $region26: #{mlp_forward.1} parent=0 // pred_check
    _
  $region27: #{mlp_forward.1} parent=0 // pred_check_branch
    %27 = sbr.rel (0) target = $region29
  $region28: #{mlp_forward.1} parent=0 // pred_region
    _
  $region29: #{mlp_forward.1} parent=0 // pred_fallthru
    _
  %v28 = vld [vmem:[%s0] sm:$0xff]
  %v29 = vld [vmem:[%s1] sm:$0x3f]
  %v30 = vld [vmem:[%s2] sm:$0x3f]
  %32 = vset.pattern.permute.xlu0 0
  %33 = vperm.xlu0 %32, %v30
  %v34 = vpop.permute.xlu0 %33
  %vm36 = vcmask 64512
  %v38 = vsel %vm36, %v29, 0
  %40 = vmatpush.msra.mxu0 0.0
  %41 = vmatpush.msra.mxu0 0.0
  %42 = vmatpush.msra.mxu0 0.0
  %43 = vmatpush.msra.mxu0 0.0
  %44 = vmatpush.msra.mxu0 0.0
  %45 = vmatpush.msra.mxu0 0.0
  %46 = vmatpush.msra.mxu0 0.0
  %47 = vmatpush.msra.mxu0 0.0
  %48 = vmatpush.msra.mxu0 0.0
  %49 = vmatpush.msra.mxu0 0.0
  %50 = vmatpush.msra.mxu0 0.0
  %51 = vmatpush.msra.mxu0 0.0
  %52 = vmatpush.msra.mxu0 0.0
  %53 = vmatpush.msra.mxu0 0.0
  %54 = vmatpush.msra.mxu0 0.0
  %55 = vmatpush.msra.mxu0 %v28
  %56 = vmatmul.f32.gmra.mxu0 %v38
  %v57 = vpop.f32.mrf.mxu0
  %v58 = vadd.f32 %v34, %v57
  %59 = vdwg.mxu0
  %v60 = vmul.f32 %v58, 0.5
  %v61 = vtanh.pop %v60
  %v62 = vmul.f32 %v61, 0.5
  %v63 = vadd.f32 %v62, 0.5
  %v64 = vld [vmem:[%s3] sm:$0xf]
  %v65 = vld [vmem:[%s4] sm:$0xf]
  %67 = vset.pattern.permute.xlu0 0
  %68 = vperm.xlu0 %67, %v65
  %v69 = vpop.permute.xlu0 %68
  %vm71 = vcmask 48128
  %v73 = vsel %vm71, %v64, 0
  %vm75 = vcmask 1045504
  %v77 = vsel %vm75, %v63, 0
  %79 = vmatpush.msra.mxu0 0.0
  %80 = vmatpush.msra.mxu0 0.0
  %81 = vmatpush.msra.mxu0 0.0
  %82 = vmatpush.msra.mxu0 0.0
  %83 = vmatpush.msra.mxu0 0.0
  %84 = vmatpush.msra.mxu0 0.0
  %85 = vmatpush.msra.mxu0 0.0
  %86 = vmatpush.msra.mxu0 0.0
  %87 = vmatpush.msra.mxu0 0.0
  %88 = vmatpush.msra.mxu0 0.0
  %89 = vmatpush.msra.mxu0 0.0
  %90 = vmatpush.msra.mxu0 0.0
  %91 = vmatpush.msra.mxu0 0.0
  %92 = vmatpush.msra.mxu0 0.0
  %93 = vmatpush.msra.mxu0 0.0
  %94 = vmatpush.msra.mxu0 %v77
  %95 = vmatmul.f32.gmra.mxu0 %v73
  %v96 = vpop.f32.mrf.mxu0
  %v97 = vadd.f32 %v69, %v96
  %98 = vdwg.mxu0
  %v99 = vmul.f32 %v97, 0.5
  %v100 = vtanh.pop %v99
  %v101 = vmul.f32 %v100, 0.5
  %v102 = vadd.f32 %v101, 0.5
  %v103 = vld [vmem:[%s5] sm:$0x1]
  %v104 = vld [vmem:[#allocation2] sm:$0x1]
  %106 = vset.pattern.permute.xlu0 0
  %107 = vperm.xlu0 %106, %v104
  %v108 = vpop.permute.xlu0 %107
  %v110 = vperm.slane %v108, 0
  %vm111 = vcmask 31744
  %v113 = vsel %vm111, %v103, 0
  %vm115 = vcmask 1043456
  %v117 = vsel %vm115, %v102, 0
  %119 = vmatpush.msra.mxu0 0.0
  %120 = vmatpush.msra.mxu0 0.0
  %121 = vmatpush.msra.mxu0 0.0
  %122 = vmatpush.msra.mxu0 0.0
  %123 = vmatpush.msra.mxu0 0.0
  %124 = vmatpush.msra.mxu0 0.0
  %125 = vmatpush.msra.mxu0 0.0
  %126 = vmatpush.msra.mxu0 0.0
  %127 = vmatpush.msra.mxu0 0.0
  %128 = vmatpush.msra.mxu0 0.0
  %129 = vmatpush.msra.mxu0 0.0
  %130 = vmatpush.msra.mxu0 0.0
  %131 = vmatpush.msra.mxu0 0.0
  %132 = vmatpush.msra.mxu0 0.0
  %133 = vmatpush.msra.mxu0 0.0
  %134 = vmatpush.msra.mxu0 %v117
  %135 = vmatmul.f32.gmra.mxu0 %v113
  %v136 = vpop.f32.mrf.mxu0
  %v137 = vadd.f32 %v110, %v136
  %138 = vdwg.mxu0
  %v139 = vmul.f32 %v137, 0.5
  %v140 = vtanh.pop %v139
  %v141 = vmul.f32 %v140, 0.5
  %v142 = vadd.f32 %v141, 0.5
  %143 = vst [vmem:[%s7] sm:$0x1] %v142
  // Predicated region
  $region30: #{mlp_forward.1} parent=0 // pred_check
    _
  $region31: #{mlp_forward.1} parent=0 // pred_check_branch
    %145 = sbr.rel (0) target = $region33
  $region32: #{mlp_forward.1} parent=0 // pred_region
    _
  $region33: #{mlp_forward.1} parent=0 // pred_fallthru
    _
  // Predicated region
  $region34: #{mlp_forward.1} parent=0 // pred_check
    _
  $region35: #{mlp_forward.1} parent=0 // pred_check_branch
    %147 = sbr.rel (0) target = $region37
  $region36: #{mlp_forward.1} parent=0 // pred_region
    _
  $region37: #{mlp_forward.1} parent=0 // pred_fallthru
    _

</llo_original>
